<compile_context>
chip_gen: v7x
topology: tpu7x:2x2x1
jax: 0.10.0
libtpu: 0.0.40
codegen_flags: <defaults>
</compile_context>

<pallas_src>
import jax
import jax.numpy as jnp
from jax.experimental import pallas as pl
from jax.experimental.pallas import tpu as pltpu


def _spike_vgg_classifier_kernel(
    x_ref, w1_ref, b1_ref, w2_ref, b2_ref, w3_ref, b3_ref, o_ref,
    h1_acc, h2_scr,
):
    """grid = (batch_tiles, k_tiles);  K (fc1 reduction) is the trailing axis."""
    k = pl.program_id(1)

    @pl.when(k == 0)
    def _():
        h1_acc[...] = jnp.zeros_like(h1_acc)

    # fc1 partial product for this K chunk: bf16 operands, f32 accumulation.
    h1_acc[...] += jnp.dot(
        x_ref[...], w1_ref[...], preferred_element_type=jnp.float32
    )

    @pl.when(k == pl.num_programs(1) - 1)
    def _():
        # fc1 epilogue: bias + ReLU in f32 (SpikeModule ~= Linear + ReLU).
        h1 = jnp.maximum(h1_acc[...] + b1_ref[...], 0.0)
        # dropout1: identity (eval mode)

        # fc2 + ReLU; stage the activation in VMEM scratch to avoid vreg spills
        # once the batch tile / hidden size grows.
        h2 = (
            jnp.dot(
                h1.astype(jnp.bfloat16), w2_ref[...],
                preferred_element_type=jnp.float32,
            )
            + b2_ref[...]
        )
        h2_scr[...] = jnp.maximum(h2, 0.0)
        # dropout2: identity (eval mode)

        # fc3 (plain Linear, no activation); output lane-padded to 128 multiple.
        o_ref[...] = (
            jnp.dot(
                h2_scr[...].astype(jnp.bfloat16), w3_ref[...],
                preferred_element_type=jnp.float32,
            )
            + b3_ref[...]
        ).astype(o_ref.dtype)


def _round_up(n, m):
    return ((n + m - 1) // m) * m


def _largest_divisor(n, candidates):
    for c in candidates:
        if c <= n and n % c == 0:
            return c
    return n


def prepare_params(params):
    """One-time conversion of PyTorch-convention weights (call OUTSIDE the hot path).

    params: w1: (H1, F), b1: (H1,), w2: (H2, H1), b2: (H2,), w3: (C, H2), b3: (C,)
    Returns transposed (in, out) bf16 weights, f32 (1, out) biases, and the class
    dimension zero-padded up to a multiple of 128 for lane-dense output stores.
    """
    w1, b1 = params["w1"], params["b1"]
    w2, b2 = params["w2"], params["b2"]
    w3, b3 = params["w3"], params["b3"]
    H1 = w1.shape[0]
    H2 = w2.shape[0]
    C = w3.shape[0]
    Cp = _round_up(C, 128)

    w3_t = jnp.asarray(w3, jnp.float32).T            # (H2, C)
    b3_r = jnp.asarray(b3, jnp.float32).reshape(1, C)
    if Cp != C:
        w3_t = jnp.pad(w3_t, ((0, 0), (0, Cp - C)))
        b3_r = jnp.pad(b3_r, ((0, 0), (0, Cp - C)))

    return {
        "w1t": jnp.asarray(w1, jnp.float32).T.astype(jnp.bfloat16),  # (F, H1)
        "b1": jnp.asarray(b1, jnp.float32).reshape(1, H1),
        "w2t": jnp.asarray(w2, jnp.float32).T.astype(jnp.bfloat16),  # (H1, H2)
        "b2": jnp.asarray(b2, jnp.float32).reshape(1, H2),
        "w3t": w3_t.astype(jnp.bfloat16),                            # (H2, Cp)
        "b3": b3_r,                                                  # (1, Cp)
        "num_classes": C,
    }


def spike_vgg_classifier(x, prepared, *, tile_b=None, k_tile=None,
                         vmem_limit_bytes=None):
    """Fused classifier head.

    x:        (B, F) float32 (flattened features)
    prepared: output of prepare_params()
    """
    B, F = x.shape
    w1t, b1 = prepared["w1t"], prepared["b1"]
    w2t, b2 = prepared["w2t"], prepared["b2"]
    w3t, b3 = prepared["w3t"], prepared["b3"]
    C = prepared["num_classes"]
    H1 = w1t.shape[1]
    H2 = w2t.shape[1]
    Cp = w3t.shape[1]

    # Batch tile: as large as divides B (128/256-class tiles on real workloads,
    # whole batch when B is small).  K tile streams W1 in manageable chunks.
    if tile_b is None:
        tile_b = _largest_divisor(B, (512, 256, 128, 64, 32, 16, 8))
    if k_tile is None:
        k_tile = _largest_divisor(F, (512, 256, 128))
    assert B % tile_b == 0, "batch must be divisible by tile_b"
    assert F % k_tile == 0, "feature dim must be divisible by k_tile"

    x_bf16 = x.astype(jnp.bfloat16)
    grid = (B // tile_b, F // k_tile)

    const = lambda i, k: (0, 0)
    out = pl.pallas_call(
        _spike_vgg_classifier_kernel,
        out_shape=jax.ShapeDtypeStruct((B, Cp), x.dtype),
        grid=grid,
        in_specs=[
            pl.BlockSpec((tile_b, k_tile), lambda i, k: (i, k)),        # x tile
            pl.BlockSpec((k_tile, H1), lambda i, k: (k, 0)),            # W1^T K-chunk
            # Constant blocks: single-buffered (no wasted 2nd VMEM copy).
            pl.BlockSpec((1, H1), const, pipeline_mode=pl.Buffered(1)),   # b1
            pl.BlockSpec((H1, H2), const, pipeline_mode=pl.Buffered(1)),  # W2^T
            pl.BlockSpec((1, H2), const, pipeline_mode=pl.Buffered(1)),   # b2
            pl.BlockSpec((H2, Cp), const, pipeline_mode=pl.Buffered(1)),  # W3^T
            pl.BlockSpec((1, Cp), const, pipeline_mode=pl.Buffered(1)),   # b3
        ],
        out_specs=pl.BlockSpec((tile_b, Cp), lambda i, k: (i, 0)),
        scratch_shapes=[
            pltpu.VMEM((tile_b, H1), jnp.float32),   # fc1 accumulator
            pltpu.VMEM((tile_b, H2), jnp.float32),   # fc2 activations
        ],
        compiler_params=pltpu.CompilerParams(
            dimension_semantics=("parallel", "arbitrary"),
            vmem_limit_bytes=vmem_limit_bytes,
        ),
    )(x_bf16, w1t, b1, w2t, b2, w3t, b3)

    return out[:, :C] if Cp != C else out


def _init_params(key, in_features, hidden1, hidden2, num_classes):
    """Deterministic synthetic init (PyTorch Linear shape conventions)."""
    ks = jax.random.split(key, 6)
    scale = 0.05
    return {
        "w1": scale * jax.random.normal(ks[0], (hidden1, in_features), jnp.float32),
        "b1": scale * jax.random.normal(ks[1], (hidden1,), jnp.float32),
        "w2": scale * jax.random.normal(ks[2], (hidden2, hidden1), jnp.float32),
        "b2": scale * jax.random.normal(ks[3], (hidden2,), jnp.float32),
        "w3": scale * jax.random.normal(ks[4], (num_classes, hidden2), jnp.float32),
        "b3": scale * jax.random.normal(ks[5], (num_classes,), jnp.float32),
    }


def _reference_bf16(x, p):
    """Reference mirroring the kernel's numerics (bf16 matmul inputs, f32 accum)."""
    bf, f32 = jnp.bfloat16, jnp.float32
    h = jnp.maximum(
        jnp.dot(x.astype(bf), p["w1"].T.astype(bf), preferred_element_type=f32)
        + p["b1"], 0.0)
    h = jnp.maximum(
        jnp.dot(h.astype(bf), p["w2"].T.astype(bf), preferred_element_type=f32)
        + p["b2"], 0.0)
    return (jnp.dot(h.astype(bf), p["w3"].T.astype(bf), preferred_element_type=f32)
            + p["b3"])


if __name__ == "__main__":
    # Small shapes consistent with a VGG classifier head (scaled down from
    # Linear(25088,4096)/Linear(4096,4096)/Linear(4096,1000); 10 classes to
    # exercise the lane-padding path).
    B, F, H1, H2, C = 8, 256, 256, 256, 10

    key = jax.random.PRNGKey(0)
    kx, kp = jax.random.split(key)
    x = jax.random.normal(kx, (B, F), jnp.float32)
    params = _init_params(kp, F, H1, H2, C)

    # One-time weight transpose / cast / pad (outside the hot path).
    prepared = prepare_params(params)

    # k_tile=128 -> two K steps, exercising the fc1 accumulation path.
    out = spike_vgg_classifier(x, prepared, k_tile=128)
    out = jax.block_until_ready(out)

    ref = _reference_bf16(x, params)
    assert out.shape == (B, C), f"bad shape {out.shape}"
    assert jnp.allclose(out, ref, atol=2e-3, rtol=2e-2), "mismatch vs. reference"

    print("KERNEL_OK")
</pallas_src>

<mosaic_0001>
module attributes {stable_mosaic.version = 11 : i64} {
  func.func @_spike_vgg_classifier_kernel(%arg0: i32, %arg1: i32, %arg2: memref<8x128xbf16, #tpu.memory_space<vmem>>, %arg3: memref<128x256xbf16, #tpu.memory_space<vmem>>, %arg4: memref<1x256xf32, #tpu.memory_space<vmem>>, %arg5: memref<256x256xbf16, #tpu.memory_space<vmem>>, %arg6: memref<1x256xf32, #tpu.memory_space<vmem>>, %arg7: memref<256x128xbf16, #tpu.memory_space<vmem>>, %arg8: memref<1x128xf32, #tpu.memory_space<vmem>>, %arg9: memref<8x128xf32, #tpu.memory_space<vmem>>, %arg10: memref<8x256xf32, #tpu.memory_space<vmem>>, %arg11: memref<8x256xf32, #tpu.memory_space<vmem>>) attributes {dimension_semantics = [#tpu.dimension_semantics<parallel>, #tpu.dimension_semantics<arbitrary>], iteration_bounds = array<i64: 1, 2>, scalar_prefetch = 0 : i64, scratch_operands = 2 : i64, tpu.core_type = #tpu.core_type<tc>, window_params = [{transform_indices = @transform_0, window_bounds = array<i64: 8, 128>}, {transform_indices = @transform_1, window_bounds = array<i64: 128, 256>}, {pipeline_mode = #tpu.pipeline_mode<synchronous>, transform_indices = @transform_2, window_bounds = array<i64: 1, 256>}, {pipeline_mode = #tpu.pipeline_mode<synchronous>, transform_indices = @transform_3, window_bounds = array<i64: 256, 256>}, {pipeline_mode = #tpu.pipeline_mode<synchronous>, transform_indices = @transform_4, window_bounds = array<i64: 1, 256>}, {pipeline_mode = #tpu.pipeline_mode<synchronous>, transform_indices = @transform_5, window_bounds = array<i64: 256, 128>}, {pipeline_mode = #tpu.pipeline_mode<synchronous>, transform_indices = @transform_6, window_bounds = array<i64: 1, 128>}, {transform_indices = @transform_7, window_bounds = array<i64: 8, 128>}]} {
    %c0_i32 = arith.constant 0 : i32
    %0 = arith.cmpi eq, %arg1, %c0_i32 : i32
    %1 = arith.extui %0 : i1 to i32
    %c0_i32_0 = arith.constant 0 : i32
    %2 = arith.cmpi ne, %1, %c0_i32_0 : i32
    scf.if %2 {
      %cst_9 = arith.constant 0.000000e+00 : f32
      %12 = vector.broadcast %cst_9 : f32 to vector<8x256xf32>
      %c0_10 = arith.constant 0 : index
      %c0_11 = arith.constant 0 : index
      %13 = vector.load %arg10[%c0_10, %c0_11] : memref<8x256xf32, #tpu.memory_space<vmem>>, vector<8x256xf32>
      tpu.vector_store %arg10[%c0_10, %c0_11], %12 {strides = array<i32>} : memref<8x256xf32, #tpu.memory_space<vmem>>, vector<8x256xf32>,
    } else {
    }
    %c0 = arith.constant 0 : index
    %c0_1 = arith.constant 0 : index
    %3 = vector.load %arg10[%c0, %c0_1] : memref<8x256xf32, #tpu.memory_space<vmem>>, vector<8x256xf32>
    %c0_2 = arith.constant 0 : index
    %c0_3 = arith.constant 0 : index
    %4 = vector.load %arg2[%c0_2, %c0_3] : memref<8x128xbf16, #tpu.memory_space<vmem>>, vector<8x128xbf16>
    %c0_4 = arith.constant 0 : index
    %c0_5 = arith.constant 0 : index
    %5 = vector.load %arg3[%c0_4, %c0_5] : memref<128x256xbf16, #tpu.memory_space<vmem>>, vector<128x256xbf16>
    %cst = arith.constant dense<0.000000e+00> : vector<8x256xf32>
    %6 = tpu.matmul %4, %5, %cst {dimension_numbers = #tpu.dot_dimension_numbers<[1], [0], [0], [1], [0, 0, 1, 1], [], []>} : vector<8x128xbf16>, vector<128x256xbf16>, vector<8x256xf32> -> vector<8x256xf32>
    %7 = arith.addf %3, %6 : vector<8x256xf32>
    %c0_6 = arith.constant 0 : index
    %c0_7 = arith.constant 0 : index
    %8 = vector.load %arg10[%c0_6, %c0_7] : memref<8x256xf32, #tpu.memory_space<vmem>>, vector<8x256xf32>
    tpu.vector_store %arg10[%c0_6, %c0_7], %7 {strides = array<i32>} : memref<8x256xf32, #tpu.memory_space<vmem>>, vector<8x256xf32>,
    %c1_i32 = arith.constant 1 : i32
    %9 = arith.cmpi eq, %arg1, %c1_i32 : i32
    %10 = arith.extui %9 : i1 to i32
    %c0_i32_8 = arith.constant 0 : i32
    %11 = arith.cmpi ne, %10, %c0_i32_8 : i32
    scf.if %11 {
      %c0_9 = arith.constant 0 : index
      %c0_10 = arith.constant 0 : index
      %12 = vector.load %arg10[%c0_9, %c0_10] : memref<8x256xf32, #tpu.memory_space<vmem>>, vector<8x256xf32>
      %c0_11 = arith.constant 0 : index
      %c0_12 = arith.constant 0 : index
      %13 = vector.load %arg4[%c0_11, %c0_12] : memref<1x256xf32, #tpu.memory_space<vmem>>, vector<1x256xf32>
      %14 = vector.broadcast %13 : vector<1x256xf32> to vector<8x256xf32>
      %15 = arith.addf %12, %14 : vector<8x256xf32>
      %cst_13 = arith.constant 0.000000e+00 : f32
      %16 = vector.broadcast %cst_13 : f32 to vector<8x256xf32>
      %17 = arith.maximumf %15, %16 : vector<8x256xf32>
      %18 = arith.truncf %17 : vector<8x256xf32> to vector<8x256xbf16>
      %c0_14 = arith.constant 0 : index
      %c0_15 = arith.constant 0 : index
      %19 = vector.load %arg5[%c0_14, %c0_15] : memref<256x256xbf16, #tpu.memory_space<vmem>>, vector<256x256xbf16>
      %cst_16 = arith.constant dense<0.000000e+00> : vector<8x256xf32>
      %20 = tpu.matmul %18, %19, %cst_16 {dimension_numbers = #tpu.dot_dimension_numbers<[1], [0], [0], [1], [0, 0, 1, 1], [], []>} : vector<8x256xbf16>, vector<256x256xbf16>, vector<8x256xf32> -> vector<8x256xf32>
      %c0_17 = arith.constant 0 : index
      %c0_18 = arith.constant 0 : index
      %21 = vector.load %arg6[%c0_17, %c0_18] : memref<1x256xf32, #tpu.memory_space<vmem>>, vector<1x256xf32>
      %22 = vector.broadcast %21 : vector<1x256xf32> to vector<8x256xf32>
      %23 = arith.addf %20, %22 : vector<8x256xf32>
      %cst_19 = arith.constant 0.000000e+00 : f32
      %24 = vector.broadcast %cst_19 : f32 to vector<8x256xf32>
      %25 = arith.maximumf %23, %24 : vector<8x256xf32>
      %c0_20 = arith.constant 0 : index
      %c0_21 = arith.constant 0 : index
      %26 = vector.load %arg11[%c0_20, %c0_21] : memref<8x256xf32, #tpu.memory_space<vmem>>, vector<8x256xf32>
      tpu.vector_store %arg11[%c0_20, %c0_21], %25 {strides = array<i32>} : memref<8x256xf32, #tpu.memory_space<vmem>>, vector<8x256xf32>,
      %c0_22 = arith.constant 0 : index
      %c0_23 = arith.constant 0 : index
      %27 = vector.load %arg11[%c0_22, %c0_23] : memref<8x256xf32, #tpu.memory_space<vmem>>, vector<8x256xf32>
      %28 = arith.truncf %27 : vector<8x256xf32> to vector<8x256xbf16>
      %c0_24 = arith.constant 0 : index
      %c0_25 = arith.constant 0 : index
      %29 = vector.load %arg7[%c0_24, %c0_25] : memref<256x128xbf16, #tpu.memory_space<vmem>>, vector<256x128xbf16>
      %cst_26 = arith.constant dense<0.000000e+00> : vector<8x128xf32>
      %30 = tpu.matmul %28, %29, %cst_26 {dimension_numbers = #tpu.dot_dimension_numbers<[1], [0], [0], [1], [0, 0, 1, 1], [], []>} : vector<8x256xbf16>, vector<256x128xbf16>, vector<8x128xf32> -> vector<8x128xf32>
      %c0_27 = arith.constant 0 : index
      %c0_28 = arith.constant 0 : index
      %31 = vector.load %arg8[%c0_27, %c0_28] : memref<1x128xf32, #tpu.memory_space<vmem>>, vector<1x128xf32>
      %32 = vector.broadcast %31 : vector<1x128xf32> to vector<8x128xf32>
      %33 = arith.addf %30, %32 : vector<8x128xf32>
      %c0_29 = arith.constant 0 : index
      %c0_30 = arith.constant 0 : index
      %34 = vector.load %arg9[%c0_29, %c0_30] : memref<8x128xf32, #tpu.memory_space<vmem>>, vector<8x128xf32>
      tpu.vector_store %arg9[%c0_29, %c0_30], %33 {strides = array<i32>} : memref<8x128xf32, #tpu.memory_space<vmem>>, vector<8x128xf32>,
    } else {
    }
    return
  }
  func.func @transform_0(%arg0: i32, %arg1: i32) -> (i32, i32) {
    %c0_i32 = arith.constant 0 : i32
    return %arg0, %arg1 : i32, i32
  }
  func.func @transform_1(%arg0: i32, %arg1: i32) -> (i32, i32) {
    %c0_i32 = arith.constant 0 : i32
    %c0_i32_0 = arith.constant 0 : i32
    return %arg1, %c0_i32 : i32, i32
  }
  func.func @transform_2(%arg0: i32, %arg1: i32) -> (i32, i32) {
    %c0_i32 = arith.constant 0 : i32
    %c0_i32_0 = arith.constant 0 : i32
    %c0_i32_1 = arith.constant 0 : i32
    return %c0_i32, %c0_i32_0 : i32, i32
  }
  func.func @transform_3(%arg0: i32, %arg1: i32) -> (i32, i32) {
    %c0_i32 = arith.constant 0 : i32
    %c0_i32_0 = arith.constant 0 : i32
    %c0_i32_1 = arith.constant 0 : i32
    return %c0_i32, %c0_i32_0 : i32, i32
  }
  func.func @transform_4(%arg0: i32, %arg1: i32) -> (i32, i32) {
    %c0_i32 = arith.constant 0 : i32
    %c0_i32_0 = arith.constant 0 : i32
    %c0_i32_1 = arith.constant 0 : i32
    return %c0_i32, %c0_i32_0 : i32, i32
  }
  func.func @transform_5(%arg0: i32, %arg1: i32) -> (i32, i32) {
    %c0_i32 = arith.constant 0 : i32
    %c0_i32_0 = arith.constant 0 : i32
    %c0_i32_1 = arith.constant 0 : i32
    return %c0_i32, %c0_i32_0 : i32, i32
  }
  func.func @transform_6(%arg0: i32, %arg1: i32) -> (i32, i32) {
    %c0_i32 = arith.constant 0 : i32
    %c0_i32_0 = arith.constant 0 : i32
    %c0_i32_1 = arith.constant 0 : i32
    return %c0_i32, %c0_i32_0 : i32, i32
  }
  func.func @transform_7(%arg0: i32, %arg1: i32) -> (i32, i32) {
    %c0_i32 = arith.constant 0 : i32
    %c0_i32_0 = arith.constant 0 : i32
    return %arg0, %c0_i32 : i32, i32
  }
}

</mosaic_0001>

<llo_original>
// kernel: tpu_custom_call.1
$region0: #{tpu_custom_call.1}
  #allocation0 [shape = 'u32[]', space=smem, size = 0x4, offset = 0x4, fixed_abs, tag = 'smem constant byte address 0x4 - core index']
  #allocation1 [shape = 'u32[144,128]{1,0:T(1,128)}', space=vmem, size = 0x12000, scoped, tag = 'internal scratch']
  #allocation2 [shape = 'f32[8,256]{1,0:T(8,128)}', space=vmem, size = 0x2000, scoped, tag = 'scratch operand']
  #allocation3 [shape = 'f32[8,256]{1,0:T(8,128)}', space=vmem, size = 0x2000, scoped, tag = 'scratch operand']
  %s0 = inlined_call_operand.hbm [shape: bf16[8,256], index: 0, kind: input, shape index: {}]
  %s1 = inlined_call_operand.hbm [shape: bf16[256,256], index: 1, kind: input, shape index: {}]
  %s2 = inlined_call_operand.vmem [shape: f32[1,256], index: 2, kind: input, shape index: {}]
  %s3 = inlined_call_operand.hbm [shape: bf16[256,256], index: 3, kind: input, shape index: {}]
  %s4 = inlined_call_operand.vmem [shape: f32[1,256], index: 4, kind: input, shape index: {}]
  %s5 = inlined_call_operand.hbm [shape: bf16[256,128], index: 5, kind: input, shape index: {}]
  %s6 = inlined_call_operand.vmem [shape: f32[1,128], index: 6, kind: input, shape index: {}]
  %s7 = inlined_call_operand.hbm [shape: f32[8,128], index: 7, kind: output, shape index: {}]
  %s8 = sld [smem:[#allocation0]]
  $region85: #{tpu_custom_call.1} parent=0
    _
  %s10 = ssub.s32 1, %s8
  %s11 = scalar_select 0, %s10, %s8
  $region1: #{tpu_custom_call.1} parent=0
    #allocation4 [shape = 'u8[4096]{0}', space=vmem, size = 0x1000, scoped, tag = 'input window, operand 0']
    #allocation5 [shape = 's32[2]{0}', space=sflag, size = 0x8, scoped, tag = 'scoped memory for tpu_custom_call.1']
    #allocation6 [shape = 's32[2]{0}', space=sflag, size = 0x8, scoped, tag = 'scoped memory for tpu_custom_call.1']
    #allocation7 [shape = 'u8[131072]{0}', space=vmem, size = 0x20000, scoped, tag = 'input window, operand 1']
    #allocation8 [shape = 's32[2]{0}', space=sflag, size = 0x8, scoped, tag = 'scoped memory for tpu_custom_call.1']
    #allocation9 [shape = 'u8[131072]{0}', space=vmem, size = 0x20000, scoped, tag = 'input window, operand 3, single buffered']
    #allocation10 [shape = 'u8[65536]{0}', space=vmem, size = 0x10000, scoped, tag = 'input window, operand 5, single buffered']
    #allocation11 [shape = 's32[1]{0}', space=sflag, size = 0x4, scoped, tag = 'scoped memory for tpu_custom_call.1']
    #allocation12 [shape = 'u8[4096]{0}', space=vmem, size = 0x1000, scoped, tag = 'output window, operand 0, single buffered']
    %12 = vsyncpa [#allocation5], 0
    %s13 = scalar_lea.sflag [#allocation5], 1
    %14 = vsyncpa %s13, 0
    %15 = vsyncpa [#allocation8], 0
    %s16 = scalar_lea.sflag [#allocation8], 1
    %17 = vsyncpa %s16, 0
    %18 = vsyncpa [#allocation11], 0
    %19 = vsyncpa [#allocation6], 0
    loop: start=0, step=1, limit=4
    $region2: #{tpu_custom_call.1} parent=1 // loop_pre_header
      _
    $region3: #{tpu_custom_call.1} parent=1 // loop_header
      %s21 = sphi 0, %s25
      %p22 = scmp.ge.s32.totalorder %s21, 4
      %s28 = sphi 0, %s40
      %s29 = sphi 0, %s36
      %s30 = sphi 0, %s28
      %s31 = sphi 0, %s29
      %s32 = sphi 0, %s30
      %s33 = sphi 0, %s31
      %s45 = sphi 0, %s47
      %s48 = sphi 0, %s45
      %s49 = sphi 0, %s48
      %s65 = sphi 0, %s49
      %s71 = sphi 0, %s73
      %s74 = sphi 0, %s71
      %s75 = sphi 0, %s74
      %s91 = sphi 0, %s75
      %s95 = sphi 0, %s95
      %s97 = sphi 0, %s95
      %s98 = sphi 0, %s97
      %s112 = sphi 0, %s98
      %s116 = sphi 0, %s116
      %s118 = sphi 0, %s116
      %s119 = sphi 0, %s118
      %s133 = sphi 0, %s119
      %s137 = sphi 0, %s137
      %s139 = sphi 0, %s137
      %s140 = sphi 0, %s139
      %s154 = sphi 0, %s140
      %s158 = sphi 0, %s158
      %s160 = sphi 0, %s158
      %s161 = sphi 0, %s160
      %s175 = sphi 0, %s161
      %s179 = sphi 0, %s179
      %s181 = sphi 0, %s179
      %s182 = sphi 0, %s181
      %s196 = sphi 0, %s182
      %s202 = sphi 0, %s204
      %s205 = sphi 0, %s202
      %s206 = sphi 0, %s205
      %s222 = sphi 0, %s206
    $region4: #{tpu_custom_call.1} parent=1 // loop_header_branch
      %24 = sbr.rel (%p22) target = $region8
    $region5: #{tpu_custom_call.1} parent=1 // loop_body
      %s26 = ssub.s32 %s21, 1
      %s27 = ssub.s32 %s21, 2
      %s34 = sadd.s32 1, %s29
      %p35 = scmp.ge.s32.totalorder %s34, 2
      %s36 = scalar_select %p35, 0, %s34
      %s37 = sadd.s32 1, %s28
      %s38 = scalar_select %p35, %s37, %s28
      %p39 = scmp.ge.s32.totalorder %s38, 1
      %s40 = scalar_select %p39, 0, %s38
      %s41 = ssub.s32 %s28, %s40
      %s42 = ssub.s32 %s29, %s36
      %s43 = sor.u32 %s41, %s42
      %p44 = scmp.eq.s32.totalorder %s43, 0
      %s46 = sadd.s32 %s45, 1
      %s47 = scalar_select %p44, %s45, %s46
      %p50 = pneg %p44
      %p51 = scmp.eq.s32.totalorder %s21, 1
      %p52 = por %p50, %p51
      %p53 = scmp.ne.s32.totalorder %s45, %s48
      %p54 = scmp.eq.s32.totalorder %s21, 0
      %p55 = por %p53, %p54
      %p56 = scmp.ne.s32.totalorder %s45, %s48
      %p57 = scmp.eq.s32.totalorder %s26, 1
      %p58 = por %p56, %p57
      %p59 = scmp.ne.s32.totalorder %s48, %s49
      %p60 = scmp.eq.s32.totalorder %s26, 0
      %p61 = por %p59, %p60
      %p62 = scmp.ne.s32.totalorder %s48, %s49
      %p63 = scmp.eq.s32.totalorder %s27, 1
      %p64 = por %p62, %p63
      %p66 = scmp.ne.s32.totalorder %s49, %s65
      %p67 = scmp.eq.s32.totalorder %s27, 0
      %p68 = por %p66, %p67
      %s69 = ssub.s32 %s29, %s36
      %p70 = scmp.eq.s32.totalorder %s69, 0
      %s72 = sadd.s32 %s71, 1
      %s73 = scalar_select %p70, %s71, %s72
      %p76 = pneg %p70
      %p77 = scmp.eq.s32.totalorder %s21, 1
      %p78 = por %p76, %p77
      %p79 = scmp.ne.s32.totalorder %s71, %s74
      %p80 = scmp.eq.s32.totalorder %s21, 0
      %p81 = por %p79, %p80
      %p82 = scmp.ne.s32.totalorder %s71, %s74
      %p83 = scmp.eq.s32.totalorder %s26, 1
      %p84 = por %p82, %p83
      %p85 = scmp.ne.s32.totalorder %s74, %s75
      %p86 = scmp.eq.s32.totalorder %s26, 0
      %p87 = por %p85, %p86
      %p88 = scmp.ne.s32.totalorder %s74, %s75
      %p89 = scmp.eq.s32.totalorder %s27, 1
      %p90 = por %p88, %p89
      %p92 = scmp.ne.s32.totalorder %s75, %s91
      %p93 = scmp.eq.s32.totalorder %s27, 0
      %p94 = por %p92, %p93
      %s96 = sadd.s32 %s95, 1
      %p99 = scmp.eq.s32.totalorder %s21, 1
      %p100 = scmp.ne.s32.totalorder %s95, %s97
      %p101 = scmp.eq.s32.totalorder %s21, 0
      %p102 = por %p100, %p101
      %p103 = scmp.ne.s32.totalorder %s95, %s97
      %p104 = scmp.eq.s32.totalorder %s26, 1
      %p105 = por %p103, %p104
      %p106 = scmp.ne.s32.totalorder %s97, %s98
      %p107 = scmp.eq.s32.totalorder %s26, 0
      %p108 = por %p106, %p107
      %p109 = scmp.ne.s32.totalorder %s97, %s98
      %p110 = scmp.eq.s32.totalorder %s27, 1
      %p111 = por %p109, %p110
      %p113 = scmp.ne.s32.totalorder %s98, %s112
      %p114 = scmp.eq.s32.totalorder %s27, 0
      %p115 = por %p113, %p114
      %s117 = sadd.s32 %s116, 1
      %p120 = scmp.eq.s32.totalorder %s21, 1
      %p121 = scmp.ne.s32.totalorder %s116, %s118
      %p122 = scmp.eq.s32.totalorder %s21, 0
      %p123 = por %p121, %p122
      %p124 = scmp.ne.s32.totalorder %s116, %s118
      %p125 = scmp.eq.s32.totalorder %s26, 1
      %p126 = por %p124, %p125
      %p127 = scmp.ne.s32.totalorder %s118, %s119
      %p128 = scmp.eq.s32.totalorder %s26, 0
      %p129 = por %p127, %p128
      %p130 = scmp.ne.s32.totalorder %s118, %s119
      %p131 = scmp.eq.s32.totalorder %s27, 1
      %p132 = por %p130, %p131
      %p134 = scmp.ne.s32.totalorder %s119, %s133
      %p135 = scmp.eq.s32.totalorder %s27, 0
      %p136 = por %p134, %p135
      %s138 = sadd.s32 %s137, 1
      %p141 = scmp.eq.s32.totalorder %s21, 1
      %p142 = scmp.ne.s32.totalorder %s137, %s139
      %p143 = scmp.eq.s32.totalorder %s21, 0
      %p144 = por %p142, %p143
      %p145 = scmp.ne.s32.totalorder %s137, %s139
      %p146 = scmp.eq.s32.totalorder %s26, 1
      %p147 = por %p145, %p146
      %p148 = scmp.ne.s32.totalorder %s139, %s140
      %p149 = scmp.eq.s32.totalorder %s26, 0
      %p150 = por %p148, %p149
      %p151 = scmp.ne.s32.totalorder %s139, %s140
      %p152 = scmp.eq.s32.totalorder %s27, 1
      %p153 = por %p151, %p152
      %p155 = scmp.ne.s32.totalorder %s140, %s154
      %p156 = scmp.eq.s32.totalorder %s27, 0
      %p157 = por %p155, %p156
      %s159 = sadd.s32 %s158, 1
      %p162 = scmp.eq.s32.totalorder %s21, 1
      %p163 = scmp.ne.s32.totalorder %s158, %s160
      %p164 = scmp.eq.s32.totalorder %s21, 0
      %p165 = por %p163, %p164
      %p166 = scmp.ne.s32.totalorder %s158, %s160
      %p167 = scmp.eq.s32.totalorder %s26, 1
      %p168 = por %p166, %p167
      %p169 = scmp.ne.s32.totalorder %s160, %s161
      %p170 = scmp.eq.s32.totalorder %s26, 0
      %p171 = por %p169, %p170
      %p172 = scmp.ne.s32.totalorder %s160, %s161
      %p173 = scmp.eq.s32.totalorder %s27, 1
      %p174 = por %p172, %p173
      %p176 = scmp.ne.s32.totalorder %s161, %s175
      %p177 = scmp.eq.s32.totalorder %s27, 0
      %p178 = por %p176, %p177
      %s180 = sadd.s32 %s179, 1
      %p183 = scmp.eq.s32.totalorder %s21, 1
      %p184 = scmp.ne.s32.totalorder %s179, %s181
      %p185 = scmp.eq.s32.totalorder %s21, 0
      %p186 = por %p184, %p185
      %p187 = scmp.ne.s32.totalorder %s179, %s181
      %p188 = scmp.eq.s32.totalorder %s26, 1
      %p189 = por %p187, %p188
      %p190 = scmp.ne.s32.totalorder %s181, %s182
      %p191 = scmp.eq.s32.totalorder %s26, 0
      %p192 = por %p190, %p191
      %p193 = scmp.ne.s32.totalorder %s181, %s182
      %p194 = scmp.eq.s32.totalorder %s27, 1
      %p195 = por %p193, %p194
      %p197 = scmp.ne.s32.totalorder %s182, %s196
      %p198 = scmp.eq.s32.totalorder %s27, 0
      %p199 = por %p197, %p198
      %s200 = ssub.s32 %s28, %s40
      %p201 = scmp.eq.s32.totalorder %s200, 0
      %s203 = sadd.s32 %s202, 1
      %s204 = scalar_select %p201, %s202, %s203
      %p207 = pneg %p201
      %p208 = scmp.eq.s32.totalorder %s21, 1
      %p209 = por %p207, %p208
      %p210 = scmp.ne.s32.totalorder %s202, %s205
      %p211 = scmp.eq.s32.totalorder %s21, 0
      %p212 = por %p210, %p211
      %p213 = scmp.ne.s32.totalorder %s202, %s205
      %p214 = scmp.eq.s32.totalorder %s26, 1
      %p215 = por %p213, %p214
      %p216 = scmp.ne.s32.totalorder %s205, %s206
      %p217 = scmp.eq.s32.totalorder %s26, 0
      %p218 = por %p216, %p217
      %p219 = scmp.ne.s32.totalorder %s205, %s206
      %p220 = scmp.eq.s32.totalorder %s27, 1
      %p221 = por %p219, %p220
      %p223 = scmp.ne.s32.totalorder %s206, %s222
      %p224 = scmp.eq.s32.totalorder %s27, 0
      %p225 = por %p223, %p224
      %p226 = scmp.le.s32.totalorder 1, %s21
      %p227 = scmp.lt.s32.totalorder %s21, 3
      %p228 = pnand %p226, %p227
      %p229 = pneg %p228
      // Predicated region
      $region9: #{tpu_custom_call.1} parent=5 // pred_check
        _
      $region10: #{tpu_custom_call.1} parent=5 // pred_check_branch
        %231 = sbr.rel (%p228) target = $region12
      $region11: #{tpu_custom_call.1} parent=5 // pred_region
        %s232 = ssub.s32 %s21, 1
        // Predicated region
        $region13: #{tpu_custom_call.1} parent=11 // pred_check
          %p233 = pneg %p108
        $region14: #{tpu_custom_call.1} parent=11 // pred_check_branch
          %235 = sbr.rel (%p233) target = $region16
        $region15: #{tpu_custom_call.1} parent=11 // pred_region
          _
        $region16: #{tpu_custom_call.1} parent=11 // pred_fallthru
          _
        // Predicated region
        $region17: #{tpu_custom_call.1} parent=11 // pred_check
          %p236 = pneg %p129
        $region18: #{tpu_custom_call.1} parent=11 // pred_check_branch
          %238 = sbr.rel (%p236) target = $region20
        $region19: #{tpu_custom_call.1} parent=11 // pred_region
          %s240 = ssub.s32 4096, 4096
          %241 = vsyncadd [#allocation8], %s240
          %s242 = sshll.u32 [#allocation9], 4
          %s243 = int_to_ptr.vmem [resolvable:$true] %s242
          %248 = dma.hbm_to_vmem [thread:$0]  %s3, 4096, %s243, [#allocation8], 128, 128, 8
        $region20: #{tpu_custom_call.1} parent=11 // pred_fallthru
          _
        // Predicated region
        $region21: #{tpu_custom_call.1} parent=11 // pred_check
          %p249 = pneg %p150
        $region22: #{tpu_custom_call.1} parent=11 // pred_check_branch
          %251 = sbr.rel (%p249) target = $region24
        $region23: #{tpu_custom_call.1} parent=11 // pred_region
          _
        $region24: #{tpu_custom_call.1} parent=11 // pred_fallthru
          _
        // Predicated region
        $region25: #{tpu_custom_call.1} parent=11 // pred_check
          %p252 = pneg %p171
        $region26: #{tpu_custom_call.1} parent=11 // pred_check_branch
          %254 = sbr.rel (%p252) target = $region28
        $region27: #{tpu_custom_call.1} parent=11 // pred_region
          %s256 = ssub.s32 2048, 2048
          %257 = vsyncadd [#allocation11], %s256
          %s258 = sshll.u32 [#allocation10], 4
          %s259 = int_to_ptr.vmem [resolvable:$true] %s258
          %264 = dma.hbm_to_vmem [thread:$0]  %s5, 2048, %s259, [#allocation11], 64, 64, 4
        $region28: #{tpu_custom_call.1} parent=11 // pred_fallthru
          _
        // Predicated region
        $region29: #{tpu_custom_call.1} parent=11 // pred_check
          %p265 = pneg %p192
        $region30: #{tpu_custom_call.1} parent=11 // pred_check_branch
          %267 = sbr.rel (%p265) target = $region32
        $region31: #{tpu_custom_call.1} parent=11 // pred_region
          _
        $region32: #{tpu_custom_call.1} parent=11 // pred_fallthru
          _
      $region12: #{tpu_custom_call.1} parent=5 // pred_fallthru
        _
      %p268 = scmp.lt.s32.totalorder %s21, 2
      // Predicated region
      $region33: #{tpu_custom_call.1} parent=5 // pred_check
        %p269 = pneg %p268
      $region34: #{tpu_custom_call.1} parent=5 // pred_check_branch
        %271 = sbr.rel (%p269) target = $region36
      $region35: #{tpu_custom_call.1} parent=5 // pred_region
        // Predicated region
        $region37: #{tpu_custom_call.1} parent=35 // pred_check
          %p272 = pneg %p55
        $region38: #{tpu_custom_call.1} parent=35 // pred_check_branch
          %274 = sbr.rel (%p272) target = $region40
        $region39: #{tpu_custom_call.1} parent=35 // pred_region
          %s275 = sand.u32 %s45, 1
          %s276 = scalar_lea.sflag [#allocation5], %s275
          %s277 = sand.u32 %s45, 1
          %s278 = smul.addr %s277, 4
          %s279 = scalar_lea.vmem [#allocation4], %s278
          %s281 = ssub.s32 64, 64
          %282 = vsyncadd %s276, %s281
          %s283 = smul.addr %s28, 2
          %s284 = sadd.s32 %s29, %s283
          %s285 = smul.addr %s284, 64
          %s286 = scalar_lea.hbm %s0, %s285
          %s288 = sshll.u32 %s279, 4
          %s289 = int_to_ptr.vmem [resolvable:$true] %s288
          %291 = dma.hbm_to_vmem [thread:$0]  %s286, 64, %s289, %s276
        $region40: #{tpu_custom_call.1} parent=35 // pred_fallthru
          _
        // Predicated region
        $region41: #{tpu_custom_call.1} parent=35 // pred_check
          %p292 = pneg %p81
        $region42: #{tpu_custom_call.1} parent=35 // pred_check_branch
          %294 = sbr.rel (%p292) target = $region44
        $region43: #{tpu_custom_call.1} parent=35 // pred_region
          %s295 = sand.u32 %s21, 1
          %s296 = scalar_lea.sflag [#allocation8], %s295
          %s297 = sand.u32 %s71, 1
          %s298 = smul.addr %s297, 128
          %s299 = scalar_lea.vmem [#allocation7], %s298
          %s300 = smul.u32 16, %s29
          %s302 = ssub.s32 2048, 2048
          %303 = vsyncadd %s296, %s302
          %s304 = smul.addr %s300, 2
          %s305 = smul.addr %s304, 64
          %s306 = scalar_lea.hbm %s1, %s305
          %s307 = sshll.u32 %s299, 4
          %s308 = int_to_ptr.vmem [resolvable:$true] %s307
          %313 = dma.hbm_to_vmem [thread:$0]  %s306, 2048, %s308, %s296, 128, 128, 8
        $region44: #{tpu_custom_call.1} parent=35 // pred_fallthru
          _
      $region36: #{tpu_custom_call.1} parent=5 // pred_fallthru
        _
      %p314 = scmp.le.s32.totalorder 1, %s21
      %p315 = scmp.lt.s32.totalorder %s21, 3
      %p316 = pnand %p314, %p315
      %p317 = pneg %p316
      // Predicated region
      $region45: #{tpu_custom_call.1} parent=5 // pred_check
        _
      $region46: #{tpu_custom_call.1} parent=5 // pred_check_branch
        %319 = sbr.rel (%p316) target = $region48
      $region47: #{tpu_custom_call.1} parent=5 // pred_region
        %s320 = ssub.s32 %s21, 1
        %s321 = sand.u32 %s48, 1
        %s322 = scalar_lea.sflag [#allocation5], %s321
        %s323 = sand.u32 %s48, 1
        %s324 = smul.addr %s323, 4
        %s325 = scalar_lea.vmem [#allocation4], %s324
        // Predicated region
        $region49: #{tpu_custom_call.1} parent=47 // pred_check
          %p326 = pneg %p61
        $region50: #{tpu_custom_call.1} parent=47 // pred_check_branch
          %328 = sbr.rel (%p326) target = $region52
        $region51: #{tpu_custom_call.1} parent=47 // pred_region
          %329 = dma.done %s322, 64
        $region52: #{tpu_custom_call.1} parent=47 // pred_fallthru
          _
        %s330 = sand.u32 %s26, 1
        %s331 = scalar_lea.sflag [#allocation8], %s330
        %s332 = sand.u32 %s74, 1
        %s333 = smul.addr %s332, 128
        %s334 = scalar_lea.vmem [#allocation7], %s333
        // Predicated region
        $region53: #{tpu_custom_call.1} parent=47 // pred_check
          %p335 = pneg %p87
        $region54: #{tpu_custom_call.1} parent=47 // pred_check_branch
          %337 = sbr.rel (%p335) target = $region56
        $region55: #{tpu_custom_call.1} parent=47 // pred_region
          %338 = dma.done %s331, 2048
        $region56: #{tpu_custom_call.1} parent=47 // pred_fallthru
          _
        // Predicated region
        $region57: #{tpu_custom_call.1} parent=47 // pred_check
          %p339 = pneg %p129
        $region58: #{tpu_custom_call.1} parent=47 // pred_check_branch
          %341 = sbr.rel (%p339) target = $region60
        $region59: #{tpu_custom_call.1} parent=47 // pred_region
          %342 = dma.done [#allocation8], 4096
        $region60: #{tpu_custom_call.1} parent=47 // pred_fallthru
          _
        // Predicated region
        $region61: #{tpu_custom_call.1} parent=47 // pred_check
          %p343 = pneg %p171
        $region62: #{tpu_custom_call.1} parent=47 // pred_check_branch
          %345 = sbr.rel (%p343) target = $region64
        $region63: #{tpu_custom_call.1} parent=47 // pred_region
          %346 = dma.done [#allocation11], 2048
        $region64: #{tpu_custom_call.1} parent=47 // pred_fallthru
          _
        %s347 = sand.u32 %s48, 1
        %s348 = scalar_lea.sflag [#allocation5], %s347
        %s349 = sand.u32 %s48, 1
        %s350 = smul.addr %s349, 4
        %s351 = scalar_lea.vmem [#allocation4], %s350
        %p352 = pneg %p61
        %p353 = pneg %p58
        %s354 = sand.u32 %s26, 1
        %s355 = scalar_lea.sflag [#allocation8], %s354
        %s356 = sand.u32 %s74, 1
        %s357 = smul.addr %s356, 128
        %s358 = scalar_lea.vmem [#allocation7], %s357
        %p359 = pneg %p87
        %p360 = pneg %p84
        %p361 = pneg %p108
        %p362 = pneg %p105
        %p363 = pneg %p129
        %p364 = pneg %p126
        %p365 = pneg %p150
        %p366 = pneg %p147
        %p367 = pneg %p171
        %p368 = pneg %p168
        %p369 = pneg %p192
        %p370 = pneg %p189
        %p371 = pneg %p218
        %p372 = pneg %p215
        %s373 = smul.u32 16, %s31
        %p375 = scmp.eq.s32.totalorder %s31, 0
        // Predicated region
        $region65: #{tpu_custom_call.1} parent=47 // pred_check
          %p376 = pneg %p375
        $region66: #{tpu_custom_call.1} parent=47 // pred_check_branch
          %378 = sbr.rel (%p376) target = $region68
        $region67: #{tpu_custom_call.1} parent=47 // pred_region
          %379 = vst [vmem:[#allocation2] sm:$0xff] 0.0
          %380 = vst [vmem:[#allocation2 + $0x8] sm:$0xff] 0.0
        $region68: #{tpu_custom_call.1} parent=47 // pred_fallthru
          _
        %v381 = vld [vmem:[#allocation2] sm:$0xff]
        %v382 = vld [vmem:[#allocation2 + $0x8] sm:$0xff]
        %v383 = vld [vmem:[%s325] sm:$0xf]
        %v384 = vld [vmem:[%s334] sm:$0xff]
        %v385 = vld [vmem:[%s334 + $0x8] sm:$0xff]
        %v386 = vld [vmem:[%s334 + $0x10] sm:$0xff]
        %v387 = vld [vmem:[%s334 + $0x18] sm:$0xff]
        %v388 = vld [vmem:[%s334 + $0x20] sm:$0xff]
        %v389 = vld [vmem:[%s334 + $0x28] sm:$0xff]
        %v390 = vld [vmem:[%s334 + $0x30] sm:$0xff]
        %v391 = vld [vmem:[%s334 + $0x38] sm:$0xff]
        %v392 = vld [vmem:[%s334 + $0x40] sm:$0xff]
        %v393 = vld [vmem:[%s334 + $0x48] sm:$0xff]
        %v394 = vld [vmem:[%s334 + $0x50] sm:$0xff]
        %v395 = vld [vmem:[%s334 + $0x58] sm:$0xff]
        %v396 = vld [vmem:[%s334 + $0x60] sm:$0xff]
        %v397 = vld [vmem:[%s334 + $0x68] sm:$0xff]
        %v398 = vld [vmem:[%s334 + $0x70] sm:$0xff]
        %v399 = vld [vmem:[%s334 + $0x78] sm:$0xff]
        %v416 = vunpack.c.l.b16 %v384
        %v417 = vunpack.c.h.b16 %v384
        %v418 = vunpack.c.l.b16 %v385
        %v419 = vunpack.c.h.b16 %v385
        %v420 = vunpack.c.l.b16 %v386
        %v421 = vunpack.c.h.b16 %v386
        %v422 = vunpack.c.l.b16 %v387
        %v423 = vunpack.c.h.b16 %v387
        %v424 = vunpack.c.l.b16 %v388
        %v425 = vunpack.c.h.b16 %v388
        %v426 = vunpack.c.l.b16 %v389
        %v427 = vunpack.c.h.b16 %v389
        %v428 = vunpack.c.l.b16 %v390
        %v429 = vunpack.c.h.b16 %v390
        %v430 = vunpack.c.l.b16 %v391
        %v431 = vunpack.c.h.b16 %v391
        %v432 = vunpack.c.l.b16 %v392
        %v433 = vunpack.c.h.b16 %v392
        %v434 = vunpack.c.l.b16 %v393
        %v435 = vunpack.c.h.b16 %v393
        %v436 = vunpack.c.l.b16 %v394
        %v437 = vunpack.c.h.b16 %v394
        %v438 = vunpack.c.l.b16 %v395
        %v439 = vunpack.c.h.b16 %v395
        %v440 = vunpack.c.l.b16 %v396
        %v441 = vunpack.c.h.b16 %v396
        %v442 = vunpack.c.l.b16 %v397
        %v443 = vunpack.c.h.b16 %v397
        %v444 = vunpack.c.l.b16 %v398
        %v445 = vunpack.c.h.b16 %v398
        %v446 = vunpack.c.l.b16 %v399
        %v447 = vunpack.c.h.b16 %v399
        %v448 = vpack.c.b16 %v418, %v416
        %v449 = vpack.c.b16 %v419, %v417
        %v450 = vpack.c.b16 %v422, %v420
        %v451 = vpack.c.b16 %v423, %v421
        %v452 = vpack.c.b16 %v426, %v424
        %v453 = vpack.c.b16 %v427, %v425
        %v454 = vpack.c.b16 %v430, %v428
        %v455 = vpack.c.b16 %v431, %v429
        %v456 = vpack.c.b16 %v434, %v432
        %v457 = vpack.c.b16 %v435, %v433
        %v458 = vpack.c.b16 %v438, %v436
        %v459 = vpack.c.b16 %v439, %v437
        %v460 = vpack.c.b16 %v442, %v440
        %v461 = vpack.c.b16 %v443, %v441
        %v462 = vpack.c.b16 %v446, %v444
        %v463 = vpack.c.b16 %v447, %v445
        %480 = vmatprep.subr.bf16.mxu0 %v449
        %481 = vmatpush1.bf16.msra.mxu0 %v448
        %482 = vmatprep.subr.bf16.mxu0 %v451
        %483 = vmatpush1.bf16.msra.mxu0 %v450
        %484 = vmatprep.subr.bf16.mxu0 %v453
        %485 = vmatpush1.bf16.msra.mxu0 %v452
        %486 = vmatprep.subr.bf16.mxu0 %v455
        %487 = vmatpush1.bf16.msra.mxu0 %v454
        %488 = vmatprep.subr.bf16.mxu0 %v457
        %489 = vmatpush1.bf16.msra.mxu0 %v456
        %490 = vmatprep.subr.bf16.mxu0 %v459
        %491 = vmatpush1.bf16.msra.mxu0 %v458
        %492 = vmatprep.subr.bf16.mxu0 %v461
        %493 = vmatpush1.bf16.msra.mxu0 %v460
        %494 = vmatprep.subr.bf16.mxu0 %v463
        %495 = vmatpush1.bf16.msra.mxu0 %v462
        %496 = vmatprep.subr.bf16.mxu0 0
        %497 = vmatpush1.bf16.msra.mxu0 0
        %498 = vmatprep.subr.bf16.mxu0 0
        %499 = vmatpush1.bf16.msra.mxu0 0
        %500 = vmatprep.subr.bf16.mxu0 0
        %501 = vmatpush1.bf16.msra.mxu0 0
        %502 = vmatprep.subr.bf16.mxu0 0
        %503 = vmatpush1.bf16.msra.mxu0 0
        %504 = vmatprep.subr.bf16.mxu0 0
        %505 = vmatpush1.bf16.msra.mxu0 0
        %506 = vmatprep.subr.bf16.mxu0 0
        %507 = vmatpush1.bf16.msra.mxu0 0
        %508 = vmatprep.subr.bf16.mxu0 0
        %509 = vmatpush1.bf16.msra.mxu0 0
        %510 = vmatprep.subr.bf16.mxu0 0
        %511 = vmatpush1.bf16.msra.mxu0 0
        %512 = vmatprep.mubr.bf16.mxu0 0
        %513 = vmatmul.mubr.bf16.gmra.mrb[0].mxu0 %v383
        %v514 = vpop.f32.mrb[0].mxu0
        %v515 = vadd.f32 0.0, %v514
        %v516 = vpop.f32.mrb[0].mxu0
        %v517 = vadd.f32 0.0, %v516
        %v518 = vpop.f32.mrb[0].mxu0
        %v519 = vpop.f32.mrb[0].mxu0
        %520 = vdwg.mxu0
        %v521 = vadd.f32 %v381, %v515
        %v522 = vadd.f32 %v382, %v517
        %523 = vst [vmem:[#allocation2] sm:$0xff] %v521
        %524 = vst [vmem:[#allocation2 + $0x8] sm:$0xff] %v522
        %p525 = scmp.eq.s32.totalorder %s31, 1
        // Predicated region
        $region69: #{tpu_custom_call.1} parent=47 // pred_check
          %p526 = pneg %p525
        $region70: #{tpu_custom_call.1} parent=47 // pred_check_branch
          %528 = sbr.rel (%p526) target = $region72
        $region71: #{tpu_custom_call.1} parent=47 // pred_region
          %v529 = vld [vmem:[#allocation2] sm:$0xff]
          %v530 = vld [vmem:[#allocation2 + $0x8] sm:$0xff]
          %v531 = vld [vmem:[%s2] sm:$0x3]
          %v533 = vlaneseq
          %v534 = vshrl.u32 %v533, 7
          %v535 = vsub.s32 0, %v534
          %v536 = vrot.slane %v531, %v535
          %v537 = vlaneseq
          %v538 = vshrl.u32 %v537, 7
          %v539 = vsub.s32 1, %v538
          %v540 = vrot.slane %v531, %v539
          %v543 = vadd.f32 %v529, %v536
          %v544 = vadd.f32 %v530, %v540
          %v545 = vmax.f32 %v543, 0.0
          %v546 = vmax.f32 %v544, 0.0
          %v547 = vpack.c.bf16 %v545, %v545
          %v548 = vpack.c.bf16 %v546, %v546
          %v549 = vld [vmem:[#allocation9] sm:$0xff]
          %v550 = vld [vmem:[#allocation9 + $0x8] sm:$0xff]
          %v551 = vld [vmem:[#allocation9 + $0x10] sm:$0xff]
          %v552 = vld [vmem:[#allocation9 + $0x18] sm:$0xff]
          %v553 = vld [vmem:[#allocation9 + $0x20] sm:$0xff]
          %v554 = vld [vmem:[#allocation9 + $0x28] sm:$0xff]
          %v555 = vld [vmem:[#allocation9 + $0x30] sm:$0xff]
          %v556 = vld [vmem:[#allocation9 + $0x38] sm:$0xff]
          %v557 = vld [vmem:[#allocation9 + $0x40] sm:$0xff]
          %v558 = vld [vmem:[#allocation9 + $0x48] sm:$0xff]
          %v559 = vld [vmem:[#allocation9 + $0x50] sm:$0xff]
          %v560 = vld [vmem:[#allocation9 + $0x58] sm:$0xff]
          %v561 = vld [vmem:[#allocation9 + $0x60] sm:$0xff]
          %v562 = vld [vmem:[#allocation9 + $0x68] sm:$0xff]
          %v563 = vld [vmem:[#allocation9 + $0x70] sm:$0xff]
          %v564 = vld [vmem:[#allocation9 + $0x78] sm:$0xff]
          %v565 = vld [vmem:[#allocation9 + $0x80] sm:$0xff]
          %v566 = vld [vmem:[#allocation9 + $0x88] sm:$0xff]
          %v567 = vld [vmem:[#allocation9 + $0x90] sm:$0xff]
          %v568 = vld [vmem:[#allocation9 + $0x98] sm:$0xff]
          %v569 = vld [vmem:[#allocation9 + $0xa0] sm:$0xff]
          %v570 = vld [vmem:[#allocation9 + $0xa8] sm:$0xff]
          %v571 = vld [vmem:[#allocation9 + $0xb0] sm:$0xff]
          %v572 = vld [vmem:[#allocation9 + $0xb8] sm:$0xff]
          %v573 = vld [vmem:[#allocation9 + $0xc0] sm:$0xff]
          %v574 = vld [vmem:[#allocation9 + $0xc8] sm:$0xff]
          %v575 = vld [vmem:[#allocation9 + $0xd0] sm:$0xff]
          %v576 = vld [vmem:[#allocation9 + $0xd8] sm:$0xff]
          %v577 = vld [vmem:[#allocation9 + $0xe0] sm:$0xff]
          %v578 = vld [vmem:[#allocation9 + $0xe8] sm:$0xff]
          %v579 = vld [vmem:[#allocation9 + $0xf0] sm:$0xff]
          %v580 = vld [vmem:[#allocation9 + $0xf8] sm:$0xff]
          %v581 = vld [vmem:[%s4] sm:$0x3]
          %v583 = vlaneseq
          %v584 = vshrl.u32 %v583, 7
          %v585 = vsub.s32 0, %v584
          %v586 = vrot.slane %v581, %v585
          %v587 = vlaneseq
          %v588 = vshrl.u32 %v587, 7
          %v589 = vsub.s32 1, %v588
          %v590 = vrot.slane %v581, %v589
          %v625 = vunpack.c.l.b16 %v549
          %v626 = vunpack.c.h.b16 %v549
          %v627 = vunpack.c.l.b16 %v550
          %v628 = vunpack.c.h.b16 %v550
          %v629 = vunpack.c.l.b16 %v551
          %v630 = vunpack.c.h.b16 %v551
          %v631 = vunpack.c.l.b16 %v552
          %v632 = vunpack.c.h.b16 %v552
          %v633 = vunpack.c.l.b16 %v553
          %v634 = vunpack.c.h.b16 %v553
          %v635 = vunpack.c.l.b16 %v554
          %v636 = vunpack.c.h.b16 %v554
          %v637 = vunpack.c.l.b16 %v555
          %v638 = vunpack.c.h.b16 %v555
          %v639 = vunpack.c.l.b16 %v556
          %v640 = vunpack.c.h.b16 %v556
          %v641 = vunpack.c.l.b16 %v557
          %v642 = vunpack.c.h.b16 %v557
          %v643 = vunpack.c.l.b16 %v558
          %v644 = vunpack.c.h.b16 %v558
          %v645 = vunpack.c.l.b16 %v559
          %v646 = vunpack.c.h.b16 %v559
          %v647 = vunpack.c.l.b16 %v560
          %v648 = vunpack.c.h.b16 %v560
          %v649 = vunpack.c.l.b16 %v561
          %v650 = vunpack.c.h.b16 %v561
          %v651 = vunpack.c.l.b16 %v562
          %v652 = vunpack.c.h.b16 %v562
          %v653 = vunpack.c.l.b16 %v563
          %v654 = vunpack.c.h.b16 %v563
          %v655 = vunpack.c.l.b16 %v564
          %v656 = vunpack.c.h.b16 %v564
          %v657 = vunpack.c.l.b16 %v565
          %v658 = vunpack.c.h.b16 %v565
          %v659 = vunpack.c.l.b16 %v566
          %v660 = vunpack.c.h.b16 %v566
          %v661 = vunpack.c.l.b16 %v567
          %v662 = vunpack.c.h.b16 %v567
          %v663 = vunpack.c.l.b16 %v568
          %v664 = vunpack.c.h.b16 %v568
          %v665 = vunpack.c.l.b16 %v569
          %v666 = vunpack.c.h.b16 %v569
          %v667 = vunpack.c.l.b16 %v570
          %v668 = vunpack.c.h.b16 %v570
          %v669 = vunpack.c.l.b16 %v571
          %v670 = vunpack.c.h.b16 %v571
          %v671 = vunpack.c.l.b16 %v572
          %v672 = vunpack.c.h.b16 %v572
          %v673 = vunpack.c.l.b16 %v573
          %v674 = vunpack.c.h.b16 %v573
          %v675 = vunpack.c.l.b16 %v574
          %v676 = vunpack.c.h.b16 %v574
          %v677 = vunpack.c.l.b16 %v575
          %v678 = vunpack.c.h.b16 %v575
          %v679 = vunpack.c.l.b16 %v576
          %v680 = vunpack.c.h.b16 %v576
          %v681 = vunpack.c.l.b16 %v577
          %v682 = vunpack.c.h.b16 %v577
          %v683 = vunpack.c.l.b16 %v578
          %v684 = vunpack.c.h.b16 %v578
          %v685 = vunpack.c.l.b16 %v579
          %v686 = vunpack.c.h.b16 %v579
          %v687 = vunpack.c.l.b16 %v580
          %v688 = vunpack.c.h.b16 %v580
          %v689 = vpack.c.b16 %v627, %v625
          %v690 = vpack.c.b16 %v628, %v626
          %v691 = vpack.c.b16 %v631, %v629
          %v692 = vpack.c.b16 %v632, %v630
          %v693 = vpack.c.b16 %v635, %v633
          %v694 = vpack.c.b16 %v636, %v634
          %v695 = vpack.c.b16 %v639, %v637
          %v696 = vpack.c.b16 %v640, %v638
          %v697 = vpack.c.b16 %v643, %v641
          %v698 = vpack.c.b16 %v644, %v642
          %v699 = vpack.c.b16 %v647, %v645
          %v700 = vpack.c.b16 %v648, %v646
          %v701 = vpack.c.b16 %v651, %v649
          %v702 = vpack.c.b16 %v652, %v650
          %v703 = vpack.c.b16 %v655, %v653
          %v704 = vpack.c.b16 %v656, %v654
          %v705 = vpack.c.b16 %v659, %v657
          %v706 = vpack.c.b16 %v660, %v658
          %v707 = vpack.c.b16 %v663, %v661
          %v708 = vpack.c.b16 %v664, %v662
          %v709 = vpack.c.b16 %v667, %v665
          %v710 = vpack.c.b16 %v668, %v666
          %v711 = vpack.c.b16 %v671, %v669
          %v712 = vpack.c.b16 %v672, %v670
          %v713 = vpack.c.b16 %v675, %v673
          %v714 = vpack.c.b16 %v676, %v674
          %v715 = vpack.c.b16 %v679, %v677
          %v716 = vpack.c.b16 %v680, %v678
          %v717 = vpack.c.b16 %v683, %v681
          %v718 = vpack.c.b16 %v684, %v682
          %v719 = vpack.c.b16 %v687, %v685
          %v720 = vpack.c.b16 %v688, %v686
          %753 = vmatprep.subr.bf16.mxu0 %v690
          %754 = vmatpush1.bf16.msra.mxu0 %v689
          %755 = vmatprep.subr.bf16.mxu0 %v692
          %756 = vmatpush1.bf16.msra.mxu0 %v691
          %757 = vmatprep.subr.bf16.mxu0 %v694
          %758 = vmatpush1.bf16.msra.mxu0 %v693
          %759 = vmatprep.subr.bf16.mxu0 %v696
          %760 = vmatpush1.bf16.msra.mxu0 %v695
          %761 = vmatprep.subr.bf16.mxu0 %v698
          %762 = vmatpush1.bf16.msra.mxu0 %v697
          %763 = vmatprep.subr.bf16.mxu0 %v700
          %764 = vmatpush1.bf16.msra.mxu0 %v699
          %765 = vmatprep.subr.bf16.mxu0 %v702
          %766 = vmatpush1.bf16.msra.mxu0 %v701
          %767 = vmatprep.subr.bf16.mxu0 %v704
          %768 = vmatpush1.bf16.msra.mxu0 %v703
          %769 = vmatprep.subr.bf16.mxu0 %v706
          %770 = vmatpush1.bf16.msra.mxu0 %v705
          %771 = vmatprep.subr.bf16.mxu0 %v708
          %772 = vmatpush1.bf16.msra.mxu0 %v707
          %773 = vmatprep.subr.bf16.mxu0 %v710
          %774 = vmatpush1.bf16.msra.mxu0 %v709
          %775 = vmatprep.subr.bf16.mxu0 %v712
          %776 = vmatpush1.bf16.msra.mxu0 %v711
          %777 = vmatprep.subr.bf16.mxu0 %v714
          %778 = vmatpush1.bf16.msra.mxu0 %v713
          %779 = vmatprep.subr.bf16.mxu0 %v716
          %780 = vmatpush1.bf16.msra.mxu0 %v715
          %781 = vmatprep.subr.bf16.mxu0 %v718
          %782 = vmatpush1.bf16.msra.mxu0 %v717
          %783 = vmatprep.subr.bf16.mxu0 %v720
          %784 = vmatpush1.bf16.msra.mxu0 %v719
          %785 = vmatprep.mubr.bf16.mxu0 %v548
          %786 = vmatmul.mubr.bf16.gmra.mrb[0].mxu0 %v547
          %v787 = vpop.f32.mrb[0].mxu0
          %v788 = vadd.f32 %v586, %v787
          %v789 = vpop.f32.mrb[0].mxu0
          %v790 = vadd.f32 %v590, %v789
          %v791 = vpop.f32.mrb[0].mxu0
          %v792 = vpop.f32.mrb[0].mxu0
          %793 = vdwg.mxu0
          %v794 = vmax.f32 %v788, 0.0
          %v795 = vmax.f32 %v790, 0.0
          %796 = vst [vmem:[#allocation3] sm:$0xff] %v794
          %797 = vst [vmem:[#allocation3 + $0x8] sm:$0xff] %v795
          %v798 = vld [vmem:[#allocation3] sm:$0xff]
          %v799 = vld [vmem:[#allocation3 + $0x8] sm:$0xff]
          %v800 = vpack.c.bf16 %v798, %v798
          %v801 = vpack.c.bf16 %v799, %v799
          %v802 = vld [vmem:[#allocation10] sm:$0xf]
          %v803 = vld [vmem:[#allocation10 + $0x4] sm:$0xf]
          %v804 = vld [vmem:[#allocation10 + $0x8] sm:$0xf]
          %v805 = vld [vmem:[#allocation10 + $0xc] sm:$0xf]
          %v806 = vld [vmem:[#allocation10 + $0x10] sm:$0xf]
          %v807 = vld [vmem:[#allocation10 + $0x14] sm:$0xf]
          %v808 = vld [vmem:[#allocation10 + $0x18] sm:$0xf]
          %v809 = vld [vmem:[#allocation10 + $0x1c] sm:$0xf]
          %v810 = vld [vmem:[#allocation10 + $0x20] sm:$0xf]
          %v811 = vld [vmem:[#allocation10 + $0x24] sm:$0xf]
          %v812 = vld [vmem:[#allocation10 + $0x28] sm:$0xf]
          %v813 = vld [vmem:[#allocation10 + $0x2c] sm:$0xf]
          %v814 = vld [vmem:[#allocation10 + $0x30] sm:$0xf]
          %v815 = vld [vmem:[#allocation10 + $0x34] sm:$0xf]
          %v816 = vld [vmem:[#allocation10 + $0x38] sm:$0xf]
          %v817 = vld [vmem:[#allocation10 + $0x3c] sm:$0xf]
          %v818 = vld [vmem:[#allocation10 + $0x40] sm:$0xf]
          %v819 = vld [vmem:[#allocation10 + $0x44] sm:$0xf]
          %v820 = vld [vmem:[#allocation10 + $0x48] sm:$0xf]
          %v821 = vld [vmem:[#allocation10 + $0x4c] sm:$0xf]
          %v822 = vld [vmem:[#allocation10 + $0x50] sm:$0xf]
          %v823 = vld [vmem:[#allocation10 + $0x54] sm:$0xf]
          %v824 = vld [vmem:[#allocation10 + $0x58] sm:$0xf]
          %v825 = vld [vmem:[#allocation10 + $0x5c] sm:$0xf]
          %v826 = vld [vmem:[#allocation10 + $0x60] sm:$0xf]
          %v827 = vld [vmem:[#allocation10 + $0x64] sm:$0xf]
          %v828 = vld [vmem:[#allocation10 + $0x68] sm:$0xf]
          %v829 = vld [vmem:[#allocation10 + $0x6c] sm:$0xf]
          %v830 = vld [vmem:[#allocation10 + $0x70] sm:$0xf]
          %v831 = vld [vmem:[#allocation10 + $0x74] sm:$0xf]
          %v832 = vld [vmem:[#allocation10 + $0x78] sm:$0xf]
          %v833 = vld [vmem:[#allocation10 + $0x7c] sm:$0xf]
          %v834 = vld [vmem:[%s6] sm:$0x1]
          %v836 = vlaneseq
          %v837 = vshrl.u32 %v836, 7
          %v838 = vsub.s32 0, %v837
          %v839 = vrot.slane %v834, %v838
          %v873 = vunpack.c.l.b16 %v802
          %v874 = vunpack.c.l.b16 %v803
          %v875 = vunpack.c.l.b16 %v804
          %v876 = vunpack.c.l.b16 %v805
          %v877 = vunpack.c.l.b16 %v806
          %v878 = vunpack.c.l.b16 %v807
          %v879 = vunpack.c.l.b16 %v808
          %v880 = vunpack.c.l.b16 %v809
          %v881 = vunpack.c.l.b16 %v810
          %v882 = vunpack.c.l.b16 %v811
          %v883 = vunpack.c.l.b16 %v812
          %v884 = vunpack.c.l.b16 %v813
          %v885 = vunpack.c.l.b16 %v814
          %v886 = vunpack.c.l.b16 %v815
          %v887 = vunpack.c.l.b16 %v816
          %v888 = vunpack.c.l.b16 %v817
          %v889 = vunpack.c.l.b16 %v818
          %v890 = vunpack.c.l.b16 %v819
          %v891 = vunpack.c.l.b16 %v820
          %v892 = vunpack.c.l.b16 %v821
          %v893 = vunpack.c.l.b16 %v822
          %v894 = vunpack.c.l.b16 %v823
          %v895 = vunpack.c.l.b16 %v824
          %v896 = vunpack.c.l.b16 %v825
          %v897 = vunpack.c.l.b16 %v826
          %v898 = vunpack.c.l.b16 %v827
          %v899 = vunpack.c.l.b16 %v828
          %v900 = vunpack.c.l.b16 %v829
          %v901 = vunpack.c.l.b16 %v830
          %v902 = vunpack.c.l.b16 %v831
          %v903 = vunpack.c.l.b16 %v832
          %v904 = vunpack.c.l.b16 %v833
          %v905 = vpack.c.b16 %v874, %v873
          %v906 = vpack.c.b16 %v876, %v875
          %v907 = vpack.c.b16 %v878, %v877
          %v908 = vpack.c.b16 %v880, %v879
          %v909 = vpack.c.b16 %v882, %v881
          %v910 = vpack.c.b16 %v884, %v883
          %v911 = vpack.c.b16 %v886, %v885
          %v912 = vpack.c.b16 %v888, %v887
          %v913 = vpack.c.b16 %v890, %v889
          %v914 = vpack.c.b16 %v892, %v891
          %v915 = vpack.c.b16 %v894, %v893
          %v916 = vpack.c.b16 %v896, %v895
          %v917 = vpack.c.b16 %v898, %v897
          %v918 = vpack.c.b16 %v900, %v899
          %v919 = vpack.c.b16 %v902, %v901
          %v920 = vpack.c.b16 %v904, %v903
          %937 = vmatprep.subr.bf16.mxu0 0
          %938 = vmatpush1.bf16.msra.mxu0 %v905
          %939 = vmatprep.subr.bf16.mxu0 0
          %940 = vmatpush1.bf16.msra.mxu0 %v906
          %941 = vmatprep.subr.bf16.mxu0 0
          %942 = vmatpush1.bf16.msra.mxu0 %v907
          %943 = vmatprep.subr.bf16.mxu0 0
          %944 = vmatpush1.bf16.msra.mxu0 %v908
          %945 = vmatprep.subr.bf16.mxu0 0
          %946 = vmatpush1.bf16.msra.mxu0 %v909
          %947 = vmatprep.subr.bf16.mxu0 0
          %948 = vmatpush1.bf16.msra.mxu0 %v910
          %949 = vmatprep.subr.bf16.mxu0 0
          %950 = vmatpush1.bf16.msra.mxu0 %v911
          %951 = vmatprep.subr.bf16.mxu0 0
          %952 = vmatpush1.bf16.msra.mxu0 %v912
          %953 = vmatprep.subr.bf16.mxu0 0
          %954 = vmatpush1.bf16.msra.mxu0 %v913
          %955 = vmatprep.subr.bf16.mxu0 0
          %956 = vmatpush1.bf16.msra.mxu0 %v914
          %957 = vmatprep.subr.bf16.mxu0 0
          %958 = vmatpush1.bf16.msra.mxu0 %v915
          %959 = vmatprep.subr.bf16.mxu0 0
          %960 = vmatpush1.bf16.msra.mxu0 %v916
          %961 = vmatprep.subr.bf16.mxu0 0
          %962 = vmatpush1.bf16.msra.mxu0 %v917
          %963 = vmatprep.subr.bf16.mxu0 0
          %964 = vmatpush1.bf16.msra.mxu0 %v918
          %965 = vmatprep.subr.bf16.mxu0 0
          %966 = vmatpush1.bf16.msra.mxu0 %v919
          %967 = vmatprep.subr.bf16.mxu0 0
          %968 = vmatpush1.bf16.msra.mxu0 %v920
          %969 = vmatprep.mubr.bf16.mxu0 %v801
          %970 = vmatmul.mubr.bf16.gmra.mrb[0].mxu0 %v800
          %v971 = vpop.f32.mrb[0].mxu0
          %v972 = vadd.f32 %v839, %v971
          %v973 = vpop.f32.mrb[0].mxu0
          %v974 = vpop.f32.mrb[0].mxu0
          %v975 = vpop.f32.mrb[0].mxu0
          %976 = vdwg.mxu0
          %977 = vst [vmem:[#allocation12] sm:$0xff] %v972
        $region72: #{tpu_custom_call.1} parent=47 // pred_fallthru
          _
        // Predicated region
        $region73: #{tpu_custom_call.1} parent=47 // pred_check
          %p978 = pneg %p215
        $region74: #{tpu_custom_call.1} parent=47 // pred_check_branch
          %980 = sbr.rel (%p978) target = $region76
        $region75: #{tpu_custom_call.1} parent=47 // pred_region
          %s982 = ssub.s32 128, 128
          %983 = vsyncadd [#allocation6], %s982
          %s984 = smul.addr %s30, 128
          %s985 = scalar_lea.hbm %s7, %s984
          %s987 = sshll.u32 [#allocation12], 4
          %s988 = int_to_ptr.vmem [resolvable:$true] %s987
          %990 = dma.vmem_to_hbm [thread:$0]  %s988, 128, %s985, [#allocation6]
        $region76: #{tpu_custom_call.1} parent=47 // pred_fallthru
          _
        // Predicated region
        $region77: #{tpu_custom_call.1} parent=47 // pred_check
          %p991 = pneg %p215
        $region78: #{tpu_custom_call.1} parent=47 // pred_check_branch
          %993 = sbr.rel (%p991) target = $region80
        $region79: #{tpu_custom_call.1} parent=47 // pred_region
          %994 = dma.done [#allocation6], 128
        $region80: #{tpu_custom_call.1} parent=47 // pred_fallthru
          _
      $region48: #{tpu_custom_call.1} parent=5 // pred_fallthru
        _
      %p995 = scmp.le.s32.totalorder 2, %s21
      // Predicated region
      $region81: #{tpu_custom_call.1} parent=5 // pred_check
        %p996 = pneg %p995
      $region82: #{tpu_custom_call.1} parent=5 // pred_check_branch
        %998 = sbr.rel (%p996) target = $region84
      $region83: #{tpu_custom_call.1} parent=5 // pred_region
        %s999 = ssub.s32 %s21, 2
      $region84: #{tpu_custom_call.1} parent=5 // pred_fallthru
        _
    $region6: #{tpu_custom_call.1} parent=1 // loop_footer
      %s25 = sadd.s32 1, %s21
    $region7: #{tpu_custom_call.1} parent=1 // loop_footer_branch
      %20 = sbr.rel target = $region3
    $region8: #{tpu_custom_call.1} parent=1 // loop_exit
      _
    %1000 = vsyncpa [#allocation5], 1
    %s1001 = scalar_lea.sflag [#allocation5], 1
    %1002 = vsyncpa %s1001, 1
    %1003 = vsyncpa [#allocation8], 1
    %s1004 = scalar_lea.sflag [#allocation8], 1
    %1005 = vsyncpa %s1004, 1
    %1006 = vsyncpa [#allocation11], 1
    %1007 = vsyncpa [#allocation6], 1
    %s1008 = scalar_lea.sflag [#allocation6], 1
    %1009 = vsyncpa %s1008, 1

</llo_original>
